<compile_context>
chip_gen: v7x
topology: tpu7x:2x2x1
jax: 0.10.0
libtpu: 0.0.40
codegen_flags: <defaults>
</compile_context>

<pallas_src>
import functools
import math

import jax
import jax.numpy as jnp
import numpy as np
from jax.experimental import pallas as pl
from jax.experimental.pallas import tpu as pltpu

_LANES = 128
# Target >= ~8 grid steps: >=2 per TensorCore on a 2-TC (v7x) chip plus
# headroom so double-buffering actually overlaps DMA with compute.
_MIN_TOTAL_GRID_STEPS = 8


def build_pe_table(embedding_dim: int, max_seq_length: int, dtype=jnp.float32) -> jnp.ndarray:
    """Positional-encoding table matching the PyTorch loop exactly.

    pe[pos, i]   = sin(pos / 10000 ** (2*i / D))        for even i
    pe[pos, i+1] = cos(pos / 10000 ** ((2*i + 1) / D))  for even i

    NOTE: the (2*i+1)/D cos exponent differs from the "Attention Is All You
    Need" paper but is exactly what the reference PyTorch module computes.
    """
    D = embedding_dim
    pos = np.arange(max_seq_length, dtype=np.float64)[:, None]           # (S, 1)
    i_even = np.arange(0, D, 2, dtype=np.float64)[None, :]               # (1, D/2)
    sin_part = np.sin(pos / np.power(10000.0, (2.0 * i_even) / D))       # (S, D/2)
    cos_part = np.cos(pos / np.power(10000.0, (2.0 * i_even + 1.0) / D))
    pe = np.zeros((max_seq_length, D), dtype=np.float32)
    pe[:, 0::2] = sin_part.astype(np.float32)
    pe[:, 1::2] = cos_part.astype(np.float32)
    return jnp.asarray(pe, dtype=dtype)                                  # (max_seq, D)


def _pos_enc_kernel(x_ref, pe_ref, o_ref, *, scale):
    # Pure VPU multiply-add.  Compute in f32 (correct for bf16 inputs on v5e,
    # which has no bf16 VPU) and cast back to the output dtype on store.
    x = x_ref[...].astype(jnp.float32)
    pe = pe_ref[...].astype(jnp.float32)
    o_ref[...] = (x * scale + pe).astype(o_ref.dtype)


def _vmem_budget():
    """Returns (target bytes per tile buffer, explicit scoped-VMEM limit)."""
    try:
        cap = pltpu.get_tpu_info().vmem_capacity_bytes
    except Exception:
        cap = 64 << 20                 # be conservative (v7x-sized VMEM)
    if cap >= (96 << 20):              # v5e / v6e: 128 MiB physical VMEM
        return 4 << 20, 48 << 20       # 4 MiB tiles; 3 arrays x 2 bufs = 24 MiB
    return 2 << 20, 32 << 20           # v7x-class: 2 MiB tiles; 12 MiB total


def _choose_tile_rows(rows: int, sublane_mult: int, bytes_per_row: int,
                      target_tile_bytes: int, batch: int) -> int:
    """Rows per block along the second-to-last axis.

    Multiple of `sublane_mult` (or the full extent for tiny inputs), capped so
    one buffer stays near `target_tile_bytes`, and shrunk until the grid has
    roughly _MIN_TOTAL_GRID_STEPS steps for pipelining / megacore.
    """
    if rows <= sublane_mult:
        return rows                                      # full-extent escape hatch
    cap = max(sublane_mult,
              (target_tile_bytes // bytes_per_row) // sublane_mult * sublane_mult)
    want_tiles = max(1, -(-_MIN_TOTAL_GRID_STEPS // batch))     # ceil(steps / B)
    per_tile = -(-rows // want_tiles)                            # ceil(rows / want)
    step_cap = max(sublane_mult, per_tile // sublane_mult * sublane_mult)
    tile = min(cap, step_cap)
    return rows if tile >= rows else tile


def positional_encoder(x: jnp.ndarray, pe_table: jnp.ndarray, embedding_dim: int,
                       *, donate_x: bool = False) -> jnp.ndarray:
    """x: (B, S, D); pe_table: (max_seq, D). Returns (B, S, D)."""
    B, S, D = x.shape
    assert D == embedding_dim
    max_seq, d_pe = pe_table.shape
    assert d_pe == D and S <= max_seq

    scale = float(math.sqrt(embedding_dim))
    target_tile_bytes, vmem_limit = _vmem_budget()

    # Feed the PE table in the activation dtype when activations are narrower
    # (halves PE HBM traffic); in-kernel math is f32 either way.
    pe_src = pe_table
    if x.dtype.itemsize < pe_table.dtype.itemsize:
        pe_src = pe_table.astype(x.dtype)

    # Sublane granularity set by the narrowest dtype touching the tiled axis:
    # 8 rows for 4-byte, 16 for 2-byte (bf16 packs two rows/sublane), 32 for 1-byte.
    min_itemsize = min(x.dtype.itemsize, pe_src.dtype.itemsize)
    sublane_mult = max(8, 32 // max(1, min_itemsize))

    L = S * D
    if L % _LANES == 0:
        # Lane-dense path: view each row-major (S, D) slab as (rows, 128) so
        # stores use all 128 lanes even when D < 128.
        rows = L // _LANES
        bytes_per_row = _LANES * x.dtype.itemsize
        tile_rows = _choose_tile_rows(rows, sublane_mult, bytes_per_row,
                                      target_tile_bytes, B)
        if tile_rows % sublane_mult == 0 and (max_seq * D) % _LANES == 0:
            # Pass the full PE table (free reshape); only the blocks covering
            # the first `rows` lane-rows are ever DMA'd.
            pe_in = pe_src.reshape(1, (max_seq * D) // _LANES, _LANES)
        else:
            # Tiny/ragged case: the row-block spans the full extent (not a
            # multiple of the sublane granularity), so slice the exact prefix
            # once (a few KiB copy) so every BlockSpec dim is full-extent.
            pe_in = pe_src.reshape(-1)[: rows * _LANES].reshape(1, rows, _LANES)
        x_in = x.reshape(B, rows, _LANES)
        R, C = rows, _LANES
    else:
        # Fallback: S*D not a multiple of 128.  Keep (S, D) layout, tile S in
        # sublane-aligned chunks (partial last tile OK), D is the full last dim.
        R, C = S, D
        bytes_per_row = D * x.dtype.itemsize
        tile_rows = _choose_tile_rows(S, sublane_mult, bytes_per_row,
                                      target_tile_bytes, B)
        pe_in = pe_src[:S, :].reshape(1, S, D)
        x_in = x

    num_tiles = pl.cdiv(R, tile_rows)
    # Batch innermost -> the shared PE block index only changes on the outer
    # (row-tile) axis, so Pallas skips the redundant PE DMA across batches.
    grid = (num_tiles, B)

    kernel = functools.partial(_pos_enc_kernel, scale=scale)

    out = pl.pallas_call(
        kernel,
        out_shape=jax.ShapeDtypeStruct((B, R, C), x.dtype),
        grid_spec=pltpu.PrefetchScalarGridSpec(
            num_scalar_prefetch=0,
            grid=grid,
            in_specs=[
                pl.BlockSpec((1, tile_rows, C), lambda t, b: (b, t, 0)),  # x tile
                pl.BlockSpec((1, tile_rows, C), lambda t, b: (0, t, 0)),  # shared PE tile
            ],
            out_specs=pl.BlockSpec((1, tile_rows, C), lambda t, b: (b, t, 0)),
        ),
        compiler_params=pltpu.CompilerParams(
            dimension_semantics=("parallel", "parallel"),
            vmem_limit_bytes=vmem_limit,
        ),
        input_output_aliases={0: 0} if donate_x else {},
    )(x_in, pe_in)

    return out.reshape(B, S, D)


def positional_encoder_ref(x, pe_table, embedding_dim):
    S = x.shape[1]
    return x * math.sqrt(embedding_dim) + pe_table[None, :S, :].astype(x.dtype)


if __name__ == "__main__":
    # Case 1: module-default-style small shapes (D=32 < 128 -> lane-flattened,
    # rows < sublane granularity -> full-extent block + PE prefix slice).
    D1, MS1, B1, S1 = 32, 64, 2, 8
    x1 = jax.random.normal(jax.random.PRNGKey(0), (B1, S1, D1), dtype=jnp.float32)
    pe1 = build_pe_table(D1, MS1)
    out1 = jax.block_until_ready(positional_encoder(x1, pe1, D1))
    ref1 = positional_encoder_ref(x1, pe1, D1)
    np.testing.assert_allclose(np.asarray(out1), np.asarray(ref1), rtol=1e-6, atol=1e-6)

    # Case 2: multi-tile lane-dense path with a masked partial last tile
    # (rows=20, tile=8) and shared-PE DMA reuse across the inner batch axis.
    D2, MS2, B2, S2 = 128, 64, 2, 20
    x2 = jax.random.normal(jax.random.PRNGKey(0), (B2, S2, D2), dtype=jnp.float32)
    pe2 = build_pe_table(D2, MS2)
    out2 = jax.block_until_ready(positional_encoder(x2, pe2, D2))
    ref2 = positional_encoder_ref(x2, pe2, D2)
    np.testing.assert_allclose(np.asarray(out2), np.asarray(ref2), rtol=1e-6, atol=1e-6)

    # Case 3: bf16 activations (16-row sublane granularity, PE fed as bf16) and
    # the input_output_aliases path (real donation needs a donating caller).
    D3, MS3, B3, S3 = 256, 64, 1, 24
    x3 = jax.random.normal(jax.random.PRNGKey(0), (B3, S3, D3), dtype=jnp.bfloat16)
    pe3 = build_pe_table(D3, MS3)
    out3 = jax.block_until_ready(positional_encoder(x3, pe3, D3, donate_x=True))
    pe3_b = pe3.astype(jnp.bfloat16).astype(jnp.float32)
    ref3 = (x3.astype(jnp.float32) * math.sqrt(D3) + pe3_b[None, :S3, :]).astype(jnp.bfloat16)
    np.testing.assert_allclose(np.asarray(out3.astype(jnp.float32)),
                               np.asarray(ref3.astype(jnp.float32)),
                               rtol=2e-2, atol=2e-2)

    # Case 4: ragged fallback (S*D not a multiple of 128) -> (S, D)-layout
    # tiling with a partial last sequence tile.
    D4, MS4, B4, S4 = 24, 32, 2, 10
    x4 = jax.random.normal(jax.random.PRNGKey(0), (B4, S4, D4), dtype=jnp.float32)
    pe4 = build_pe_table(D4, MS4)
    out4 = jax.block_until_ready(positional_encoder(x4, pe4, D4))
    ref4 = positional_encoder_ref(x4, pe4, D4)
    np.testing.assert_allclose(np.asarray(out4), np.asarray(ref4), rtol=1e-6, atol=1e-6)

    print("KERNEL_OK")
</pallas_src>

<mosaic_0001>
module attributes {stable_mosaic.version = 11 : i64} {
  func.func @_pos_enc_kernel(%arg0: i32, %arg1: i32, %arg2: memref<1x2x128xf32, #tpu.memory_space<vmem>>, %arg3: memref<1x2x128xf32, #tpu.memory_space<vmem>>, %arg4: memref<1x2x128xf32, #tpu.memory_space<vmem>>) attributes {dimension_semantics = [#tpu.dimension_semantics<parallel>, #tpu.dimension_semantics<parallel>], iteration_bounds = array<i64: 1, 2>, scalar_prefetch = 0 : i64, scratch_operands = 0 : i64, tpu.core_type = #tpu.core_type<tc>, window_params = [{transform_indices = @transform_0, window_bounds = array<i64: 1, 2, 128>}, {transform_indices = @transform_1, window_bounds = array<i64: 1, 2, 128>}, {transform_indices = @transform_2, window_bounds = array<i64: 1, 2, 128>}]} {
    %c0 = arith.constant 0 : index
    %c0_0 = arith.constant 0 : index
    %c0_1 = arith.constant 0 : index
    %0 = vector.load %arg2[%c0, %c0_0, %c0_1] : memref<1x2x128xf32, #tpu.memory_space<vmem>>, vector<1x2x128xf32>
    %c0_2 = arith.constant 0 : index
    %c0_3 = arith.constant 0 : index
    %c0_4 = arith.constant 0 : index
    %1 = vector.load %arg3[%c0_2, %c0_3, %c0_4] : memref<1x2x128xf32, #tpu.memory_space<vmem>>, vector<1x2x128xf32>
    %cst = arith.constant 5.65685415 : f32
    %2 = vector.broadcast %cst : f32 to vector<1x2x128xf32>
    %3 = arith.mulf %0, %2 : vector<1x2x128xf32>
    %4 = arith.addf %3, %1 : vector<1x2x128xf32>
    %c0_5 = arith.constant 0 : index
    %c0_6 = arith.constant 0 : index
    %c0_7 = arith.constant 0 : index
    %5 = vector.load %arg4[%c0_5, %c0_6, %c0_7] : memref<1x2x128xf32, #tpu.memory_space<vmem>>, vector<1x2x128xf32>
    tpu.vector_store %arg4[%c0_5, %c0_6, %c0_7], %4 {strides = array<i32>} : memref<1x2x128xf32, #tpu.memory_space<vmem>>, vector<1x2x128xf32>,
    return
  }
  func.func @transform_0(%arg0: i32, %arg1: i32) -> (i32, i32, i32) {
    %c0_i32 = arith.constant 0 : i32
    %c0_i32_0 = arith.constant 0 : i32
    return %arg1, %arg0, %c0_i32 : i32, i32, i32
  }
  func.func @transform_1(%arg0: i32, %arg1: i32) -> (i32, i32, i32) {
    %c0_i32 = arith.constant 0 : i32
    %c0_i32_0 = arith.constant 0 : i32
    %c0_i32_1 = arith.constant 0 : i32
    return %c0_i32, %arg0, %c0_i32_0 : i32, i32, i32
  }
  func.func @transform_2(%arg0: i32, %arg1: i32) -> (i32, i32, i32) {
    %c0_i32 = arith.constant 0 : i32
    %c0_i32_0 = arith.constant 0 : i32
    return %arg1, %arg0, %c0_i32 : i32, i32, i32
  }
}

</mosaic_0001>

<llo_original>
// kernel: tpu_custom_call.1
$region0: #{tpu_custom_call.1}
  #allocation0 [shape = 'u32[]', space=smem, size = 0x4, offset = 0x4, fixed_abs, tag = 'smem constant byte address 0x4 - core index']
  #allocation1 [shape = 'u32[144,128]{1,0:T(1,128)}', space=vmem, size = 0x12000, scoped, tag = 'internal scratch']
  %s0 = inlined_call_operand.hbm [shape: f32[2,2,128], index: 0, kind: input, shape index: {}]
  %s1 = inlined_call_operand.vmem [shape: f32[1,2,128], index: 1, kind: input, shape index: {}]
  %s2 = inlined_call_operand.hbm [shape: f32[2,2,128], index: 2, kind: output, shape index: {}]
  %s3 = sld [smem:[#allocation0]]
  $region45: #{tpu_custom_call.1} parent=0
    _
  %s5 = ssub.s32 1, %s3
  %s6 = scalar_select 0, %s5, %s3
  $region1: #{tpu_custom_call.1} parent=0
    #allocation2 [shape = 'u8[2048]{0}', space=vmem, size = 0x800, scoped, tag = 'input window, operand 0']
    #allocation3 [shape = 's32[2]{0}', space=sflag, size = 0x8, scoped, tag = 'scoped memory for tpu_custom_call.1']
    #allocation4 [shape = 's32[2]{0}', space=sflag, size = 0x8, scoped, tag = 'scoped memory for tpu_custom_call.1']
    #allocation5 [shape = 'u8[2048]{0}', space=vmem, size = 0x800, scoped, tag = 'output window, operand 0']
    %7 = vsyncpa [#allocation3], 0
    %s8 = scalar_lea.sflag [#allocation3], 1
    %9 = vsyncpa %s8, 0
    %10 = vsyncpa [#allocation4], 0
    %s11 = scalar_lea.sflag [#allocation4], 1
    %12 = vsyncpa %s11, 0
    loop: start=0, step=1, limit=4
    $region2: #{tpu_custom_call.1} parent=1 // loop_pre_header
      _
    $region3: #{tpu_custom_call.1} parent=1 // loop_header
      %s14 = sphi 0, %s18
      %p15 = scmp.ge.s32.totalorder %s14, 4
      %s21 = sphi 0, %s33
      %s22 = sphi 0, %s29
      %s23 = sphi 0, %s21
      %s24 = sphi 0, %s22
      %s25 = sphi 0, %s23
      %s26 = sphi 0, %s24
      %s38 = sphi 0, %s40
      %s41 = sphi 0, %s38
      %s42 = sphi 0, %s41
      %s58 = sphi 0, %s42
      %s64 = sphi 0, %s66
      %s67 = sphi 0, %s64
      %s68 = sphi 0, %s67
      %s84 = sphi 0, %s68
      %s92 = sphi 0, %s94
      %s95 = sphi 0, %s92
      %s96 = sphi 0, %s95
      %s112 = sphi 0, %s96
    $region4: #{tpu_custom_call.1} parent=1 // loop_header_branch
      %17 = sbr.rel (%p15) target = $region8
    $region5: #{tpu_custom_call.1} parent=1 // loop_body
      %s19 = ssub.s32 %s14, 1
      %s20 = ssub.s32 %s14, 2
      %s27 = sadd.s32 1, %s22
      %p28 = scmp.ge.s32.totalorder %s27, 2
      %s29 = scalar_select %p28, 0, %s27
      %s30 = sadd.s32 1, %s21
      %s31 = scalar_select %p28, %s30, %s21
      %p32 = scmp.ge.s32.totalorder %s31, 1
      %s33 = scalar_select %p32, 0, %s31
      %s34 = ssub.s32 %s22, %s29
      %s35 = ssub.s32 %s21, %s33
      %s36 = sor.u32 %s34, %s35
      %p37 = scmp.eq.s32.totalorder %s36, 0
      %s39 = sadd.s32 %s38, 1
      %s40 = scalar_select %p37, %s38, %s39
      %p43 = pneg %p37
      %p44 = scmp.eq.s32.totalorder %s14, 1
      %p45 = por %p43, %p44
      %p46 = scmp.ne.s32.totalorder %s38, %s41
      %p47 = scmp.eq.s32.totalorder %s14, 0
      %p48 = por %p46, %p47
      %p49 = scmp.ne.s32.totalorder %s38, %s41
      %p50 = scmp.eq.s32.totalorder %s19, 1
      %p51 = por %p49, %p50
      %p52 = scmp.ne.s32.totalorder %s41, %s42
      %p53 = scmp.eq.s32.totalorder %s19, 0
      %p54 = por %p52, %p53
      %p55 = scmp.ne.s32.totalorder %s41, %s42
      %p56 = scmp.eq.s32.totalorder %s20, 1
      %p57 = por %p55, %p56
      %p59 = scmp.ne.s32.totalorder %s42, %s58
      %p60 = scmp.eq.s32.totalorder %s20, 0
      %p61 = por %p59, %p60
      %s62 = ssub.s32 %s21, %s33
      %p63 = scmp.eq.s32.totalorder %s62, 0
      %s65 = sadd.s32 %s64, 1
      %s66 = scalar_select %p63, %s64, %s65
      %p69 = pneg %p63
      %p70 = scmp.eq.s32.totalorder %s14, 1
      %p71 = por %p69, %p70
      %p72 = scmp.ne.s32.totalorder %s64, %s67
      %p73 = scmp.eq.s32.totalorder %s14, 0
      %p74 = por %p72, %p73
      %p75 = scmp.ne.s32.totalorder %s64, %s67
      %p76 = scmp.eq.s32.totalorder %s19, 1
      %p77 = por %p75, %p76
      %p78 = scmp.ne.s32.totalorder %s67, %s68
      %p79 = scmp.eq.s32.totalorder %s19, 0
      %p80 = por %p78, %p79
      %p81 = scmp.ne.s32.totalorder %s67, %s68
      %p82 = scmp.eq.s32.totalorder %s20, 1
      %p83 = por %p81, %p82
      %p85 = scmp.ne.s32.totalorder %s68, %s84
      %p86 = scmp.eq.s32.totalorder %s20, 0
      %p87 = por %p85, %p86
      %s88 = ssub.s32 %s22, %s29
      %s89 = ssub.s32 %s21, %s33
      %s90 = sor.u32 %s88, %s89
      %p91 = scmp.eq.s32.totalorder %s90, 0
      %s93 = sadd.s32 %s92, 1
      %s94 = scalar_select %p91, %s92, %s93
      %p97 = pneg %p91
      %p98 = scmp.eq.s32.totalorder %s14, 1
      %p99 = por %p97, %p98
      %p100 = scmp.ne.s32.totalorder %s92, %s95
      %p101 = scmp.eq.s32.totalorder %s14, 0
      %p102 = por %p100, %p101
      %p103 = scmp.ne.s32.totalorder %s92, %s95
      %p104 = scmp.eq.s32.totalorder %s19, 1
      %p105 = por %p103, %p104
      %p106 = scmp.ne.s32.totalorder %s95, %s96
      %p107 = scmp.eq.s32.totalorder %s19, 0
      %p108 = por %p106, %p107
      %p109 = scmp.ne.s32.totalorder %s95, %s96
      %p110 = scmp.eq.s32.totalorder %s20, 1
      %p111 = por %p109, %p110
      %p113 = scmp.ne.s32.totalorder %s96, %s112
      %p114 = scmp.eq.s32.totalorder %s20, 0
      %p115 = por %p113, %p114
      %p116 = scmp.le.s32.totalorder 1, %s14
      %p117 = scmp.lt.s32.totalorder %s14, 3
      %p118 = pnand %p116, %p117
      %p119 = pneg %p118
      // Predicated region
      $region9: #{tpu_custom_call.1} parent=5 // pred_check
        _
      $region10: #{tpu_custom_call.1} parent=5 // pred_check_branch
        %121 = sbr.rel (%p118) target = $region12
      $region11: #{tpu_custom_call.1} parent=5 // pred_region
        %s122 = ssub.s32 %s14, 1
        // Predicated region
        $region13: #{tpu_custom_call.1} parent=11 // pred_check
          %p123 = pneg %p80
        $region14: #{tpu_custom_call.1} parent=11 // pred_check_branch
          %125 = sbr.rel (%p123) target = $region16
        $region15: #{tpu_custom_call.1} parent=11 // pred_region
          %p126 = scmp.lt.s32.totalorder %s23, 0
          %s127 = scalar_select %p126, %s23, 0
          %s128 = smul.addr %s127, 2
          %s129 = scalar_lea.vmem %s1, %s128
        $region16: #{tpu_custom_call.1} parent=11 // pred_fallthru
          _
      $region12: #{tpu_custom_call.1} parent=5 // pred_fallthru
        _
      %p130 = scmp.lt.s32.totalorder %s14, 2
      // Predicated region
      $region17: #{tpu_custom_call.1} parent=5 // pred_check
        %p131 = pneg %p130
      $region18: #{tpu_custom_call.1} parent=5 // pred_check_branch
        %133 = sbr.rel (%p131) target = $region20
      $region19: #{tpu_custom_call.1} parent=5 // pred_region
        // Predicated region
        $region21: #{tpu_custom_call.1} parent=19 // pred_check
          %p134 = pneg %p48
        $region22: #{tpu_custom_call.1} parent=19 // pred_check_branch
          %136 = sbr.rel (%p134) target = $region24
        $region23: #{tpu_custom_call.1} parent=19 // pred_region
          %s137 = sand.u32 %s38, 1
          %s138 = scalar_lea.sflag [#allocation3], %s137
          %s139 = sand.u32 %s38, 1
          %s140 = smul.addr %s139, 2
          %s141 = scalar_lea.vmem [#allocation2], %s140
          %s143 = ssub.s32 32, 32
          %144 = vsyncadd %s138, %s143
          %s145 = sadd.s32 %s21, %s22
          %s146 = smul.addr %s145, 32
          %s147 = scalar_lea.hbm %s0, %s146
          %s149 = sshll.u32 %s141, 4
          %s150 = int_to_ptr.vmem [resolvable:$true] %s149
          %152 = dma.hbm_to_vmem [thread:$0]  %s147, 32, %s150, %s138
        $region24: #{tpu_custom_call.1} parent=19 // pred_fallthru
          _
      $region20: #{tpu_custom_call.1} parent=5 // pred_fallthru
        _
      %p153 = scmp.le.s32.totalorder 1, %s14
      %p154 = scmp.lt.s32.totalorder %s14, 3
      %p155 = pnand %p153, %p154
      %p156 = pneg %p155
      // Predicated region
      $region25: #{tpu_custom_call.1} parent=5 // pred_check
        _
      $region26: #{tpu_custom_call.1} parent=5 // pred_check_branch
        %158 = sbr.rel (%p155) target = $region28
      $region27: #{tpu_custom_call.1} parent=5 // pred_region
        %s159 = ssub.s32 %s14, 1
        %s160 = sand.u32 %s41, 1
        %s161 = scalar_lea.sflag [#allocation3], %s160
        %s162 = sand.u32 %s41, 1
        %s163 = smul.addr %s162, 2
        %s164 = scalar_lea.vmem [#allocation2], %s163
        // Predicated region
        $region29: #{tpu_custom_call.1} parent=27 // pred_check
          %p165 = pneg %p54
        $region30: #{tpu_custom_call.1} parent=27 // pred_check_branch
          %167 = sbr.rel (%p165) target = $region32
        $region31: #{tpu_custom_call.1} parent=27 // pred_region
          %168 = dma.done %s161, 32
        $region32: #{tpu_custom_call.1} parent=27 // pred_fallthru
          _
        %s169 = sand.u32 %s41, 1
        %s170 = scalar_lea.sflag [#allocation3], %s169
        %s171 = sand.u32 %s41, 1
        %s172 = smul.addr %s171, 2
        %s173 = scalar_lea.vmem [#allocation2], %s172
        %p174 = pneg %p54
        %p175 = pneg %p51
        %p176 = scmp.lt.s32.totalorder %s23, 0
        %s177 = scalar_select %p176, %s23, 0
        %s178 = smul.addr %s177, 2
        %s179 = scalar_lea.vmem %s1, %s178
        %p180 = pneg %p80
        %p181 = pneg %p77
        %p182 = pneg %p108
        %p183 = pneg %p105
        %s184 = sand.u32 %s95, 1
        %s185 = scalar_lea.sflag [#allocation4], %s184
        %s186 = sand.u32 %s95, 1
        %s187 = smul.addr %s186, 2
        %s188 = scalar_lea.vmem [#allocation5], %s187
        %p189 = scmp.lt.s32.totalorder %s23, 0
        %s190 = scalar_select %p189, %s23, 0
        %s191 = smul.addr %s190, 2
        %s192 = scalar_lea.vmem %s1, %s191
        %v193 = vld [vmem:[%s164] sm:$0x3]
        %v194 = vld [vmem:[%s192] sm:$0x3]
        %v195 = vmul.f32 %v193, 5.656854
        %v196 = vadd.f32 %v195, %v194
        %197 = vst [vmem:[%s188] sm:$0x3] %v196
        %s198 = sand.u32 %s95, 1
        %s199 = scalar_lea.sflag [#allocation4], %s198
        %s200 = sand.u32 %s95, 1
        %s201 = smul.addr %s200, 2
        %s202 = scalar_lea.vmem [#allocation5], %s201
        // Predicated region
        $region33: #{tpu_custom_call.1} parent=27 // pred_check
          %p203 = pneg %p105
        $region34: #{tpu_custom_call.1} parent=27 // pred_check_branch
          %205 = sbr.rel (%p203) target = $region36
        $region35: #{tpu_custom_call.1} parent=27 // pred_region
          %s207 = ssub.s32 32, 32
          %208 = vsyncadd %s199, %s207
          %s209 = sadd.s32 %s23, %s24
          %s210 = smul.addr %s209, 32
          %s211 = scalar_lea.hbm %s2, %s210
          %s213 = sshll.u32 %s202, 4
          %s214 = int_to_ptr.vmem [resolvable:$true] %s213
          %216 = dma.vmem_to_hbm [thread:$0]  %s214, 32, %s211, %s199
        $region36: #{tpu_custom_call.1} parent=27 // pred_fallthru
          _
      $region28: #{tpu_custom_call.1} parent=5 // pred_fallthru
        _
      %p217 = scmp.le.s32.totalorder 2, %s14
      // Predicated region
      $region37: #{tpu_custom_call.1} parent=5 // pred_check
        %p218 = pneg %p217
      $region38: #{tpu_custom_call.1} parent=5 // pred_check_branch
        %220 = sbr.rel (%p218) target = $region40
      $region39: #{tpu_custom_call.1} parent=5 // pred_region
        %s221 = ssub.s32 %s14, 2
        // Predicated region
        $region41: #{tpu_custom_call.1} parent=39 // pred_check
          %p222 = pneg %p111
        $region42: #{tpu_custom_call.1} parent=39 // pred_check_branch
          %224 = sbr.rel (%p222) target = $region44
        $region43: #{tpu_custom_call.1} parent=39 // pred_region
          %s225 = sand.u32 %s96, 1
          %s226 = scalar_lea.sflag [#allocation4], %s225
          %s227 = sand.u32 %s96, 1
          %s228 = smul.addr %s227, 2
          %s229 = scalar_lea.vmem [#allocation5], %s228
          %230 = dma.done %s226, 32
        $region44: #{tpu_custom_call.1} parent=39 // pred_fallthru
          _
      $region40: #{tpu_custom_call.1} parent=5 // pred_fallthru
        _
    $region6: #{tpu_custom_call.1} parent=1 // loop_footer
      %s18 = sadd.s32 1, %s14
    $region7: #{tpu_custom_call.1} parent=1 // loop_footer_branch
      %13 = sbr.rel target = $region3
    $region8: #{tpu_custom_call.1} parent=1 // loop_exit
      _
    %231 = vsyncpa [#allocation3], 1
    %s232 = scalar_lea.sflag [#allocation3], 1
    %233 = vsyncpa %s232, 1
    %234 = vsyncpa [#allocation4], 1
    %s235 = scalar_lea.sflag [#allocation4], 1
    %236 = vsyncpa %s235, 1

</llo_original>
